<compile_context>
chip_gen: v5e
topology: v5e:2x2
jax: 0.10.0
libtpu: 0.0.40
codegen_flags: <defaults>
</compile_context>

<pallas_src>
import jax
import jax.numpy as jnp
from jax.experimental import pallas as pl
from jax.experimental.pallas import tpu as pltpu


def _mixer_kernel(qs_ref, st_ref, wt_ref, bw_ref, out_ref):
    # logits = states @ W^T + b   -> (TM, A), f32 accumulation on the MXU.
    logits = jnp.dot(
        st_ref[...], wt_ref[...], preferred_element_type=jnp.float32
    )
    logits = logits + bw_ref[...].astype(jnp.float32)  # broadcast (1, A)

    # Softmax over the agent axis (last dim, only A lanes active).
    m = jnp.max(logits, axis=-1, keepdims=True)
    p = jnp.exp(logits - m)
    denom = jnp.sum(p, axis=-1, keepdims=True)
    w = p * pl.reciprocal(denom, approx=True)           # EUP vrcp, free slot

    # Weighted sum of agent Q-values; emit a lane-dense (1, 1, TM) row slab.
    x = qs_ref[...].astype(jnp.float32) * w
    row = jnp.sum(x, axis=-1)                            # (TM,)
    out_ref[...] = row.reshape(out_ref.shape).astype(out_ref.dtype)


def linear_mixer_forward(agent_qs, states, W, b, *, tm_cap=2048):
    """agent_qs: (B, T, A); states: (B, T, *state_shape); W: (A, S); b: (A,).

    agent_qs / states may be f32 or bf16; they are passed to the kernel in
    their native dtype (halving HBM traffic for bf16) and cast to f32 inside.
    """
    B, T, A = agent_qs.shape
    S = W.shape[1]
    N = B * T

    qs = agent_qs.reshape(N, A)          # (N, A), native dtype
    st = states.reshape(N, S)            # (N, S), native dtype
    wt = W.T                             # (S, A), resident in VMEM
    bw = b.reshape(1, A)                 # (1, A), resident in VMEM

    # Row tile: as big as the VMEM budget allows (default scoped limit is
    # 32 MiB and the runtime double-buffers each input), capped so the single
    # 'parallel' axis still has >= 2 blocks (v7x megacore sharding; neutral
    # on v5e/v6e), and a multiple of 8 (sublane granularity).
    itemsize = max(qs.dtype.itemsize, st.dtype.itemsize)
    per_row_bytes = 2 * (S + A) * itemsize + 2 * 4       # 2x buffered in + out
    vmem_rows = max(8, (8 * 1024 * 1024) // per_row_bytes)
    half = -(-N // 2)
    tm = min(tm_cap, vmem_rows, max(8, ((half + 7) // 8) * 8))
    tm = (tm // 8) * 8
    num_tiles = pl.cdiv(N, tm)           # partial last block: masked DMA

    cost = pl.CostEstimate(
        flops=2 * N * S * A + 6 * N * A,
        transcendentals=N * A,
        bytes_accessed=(qs.size * qs.dtype.itemsize
                        + st.size * st.dtype.itemsize
                        + wt.size * 4 + bw.size * 4
                        + num_tiles * tm * 4),
    )

    out = pl.pallas_call(
        _mixer_kernel,
        out_shape=jax.ShapeDtypeStruct((num_tiles, 1, tm), jnp.float32),
        grid_spec=pltpu.PrefetchScalarGridSpec(
            num_scalar_prefetch=0,
            grid=(num_tiles,),
            in_specs=[
                pl.BlockSpec((tm, A), lambda i: (i, 0)),   # agent_qs rows
                pl.BlockSpec((tm, S), lambda i: (i, 0)),   # state rows
                pl.BlockSpec((S, A), lambda i: (0, 0)),    # W^T (resident)
                pl.BlockSpec((1, A), lambda i: (0, 0)),    # bias (resident)
            ],
            # Lane-dense output slab: one (1, 1, tm) row per grid step.
            out_specs=pl.BlockSpec((1, 1, tm), lambda i: (i, 0, 0)),
        ),
        compiler_params=pltpu.CompilerParams(
            dimension_semantics=("parallel",)
        ),
        cost_estimate=cost,
    )(qs, st, wt, bw)

    # Tail rows beyond N (from the partial last input block) are garbage and
    # discarded here; they never mix with valid rows (all math is row-local).
    return out.reshape(num_tiles * tm)[:N].reshape(B, T, 1)


def _reference(agent_qs, states, W, b):
    B, T, A = agent_qs.shape
    S = W.shape[1]
    st = states.reshape(-1, S).astype(jnp.float32)
    logits = st @ W.T.astype(jnp.float32) + b.astype(jnp.float32)
    w = jax.nn.softmax(logits, axis=-1).reshape(B, T, A)
    x = agent_qs.astype(jnp.float32) * w
    return jnp.sum(x, axis=2, keepdims=True)


if __name__ == "__main__":
    # Synthetic "args": n_agents=4, state_shape=(8, 4) -> state_dim=32.
    n_agents = 4
    state_shape = (8, 4)
    state_dim = 32
    # T=13 makes N=26 non-divisible by the tile -> exercises the masked tail.
    B, T = 2, 13

    key = jax.random.PRNGKey(0)
    k_qs, k_st, k_w, k_b = jax.random.split(key, 4)

    agent_qs = jax.random.normal(k_qs, (B, T, n_agents), dtype=jnp.float32)
    states = jax.random.normal(k_st, (B, T) + state_shape, dtype=jnp.float32)

    # Deterministic nn.Linear(state_dim, n_agents)-shaped params.
    bound = 1.0 / (state_dim ** 0.5)
    W = jax.random.uniform(
        k_w, (n_agents, state_dim), minval=-bound, maxval=bound,
        dtype=jnp.float32)
    b = jax.random.uniform(
        k_b, (n_agents,), minval=-bound, maxval=bound, dtype=jnp.float32)

    # TODO(synk): type='V' path (alpha*logsumexp mixing) and abs='abs'/'relu'
    # variants (extra nn.Linear bias head) are not exercised by the default
    # forward and are omitted.

    out = linear_mixer_forward(agent_qs, states, W, b)
    out = jax.block_until_ready(out)

    ref = _reference(agent_qs, states, W, b)
    assert out.shape == (B, T, 1)
    # Tolerance loosened slightly (approx reciprocal on the softmax denom).
    assert jnp.allclose(out, ref, atol=2e-3, rtol=2e-3), float(
        jnp.max(jnp.abs(out - ref)))

    print("KERNEL_OK")
</pallas_src>

<mosaic_0001>
module attributes {stable_mosaic.version = 11 : i64} {
  func.func @_mixer_kernel(%arg0: i32, %arg1: memref<16x4xf32, #tpu.memory_space<vmem>>, %arg2: memref<16x32xf32, #tpu.memory_space<vmem>>, %arg3: memref<32x4xf32, #tpu.memory_space<vmem>>, %arg4: memref<1x4xf32, #tpu.memory_space<vmem>>, %arg5: memref<1x1x16xf32, #tpu.memory_space<vmem>>) attributes {dimension_semantics = [#tpu.dimension_semantics<parallel>], iteration_bounds = array<i64: 2>, scalar_prefetch = 0 : i64, scratch_operands = 0 : i64, tpu.core_type = #tpu.core_type<tc>, window_params = [{transform_indices = @transform_0, window_bounds = array<i64: 16, 4>}, {transform_indices = @transform_1, window_bounds = array<i64: 16, 32>}, {pipeline_mode = #tpu.pipeline_mode<synchronous>, transform_indices = @transform_2, window_bounds = array<i64: 32, 4>}, {pipeline_mode = #tpu.pipeline_mode<synchronous>, transform_indices = @transform_3, window_bounds = array<i64: 1, 4>}, {transform_indices = @transform_4, window_bounds = array<i64: 1, 1, 16>}]} {
    %c0 = arith.constant 0 : index
    %c0_0 = arith.constant 0 : index
    %0 = vector.load %arg2[%c0, %c0_0] : memref<16x32xf32, #tpu.memory_space<vmem>>, vector<16x32xf32>
    %c0_1 = arith.constant 0 : index
    %c0_2 = arith.constant 0 : index
    %1 = vector.load %arg3[%c0_1, %c0_2] : memref<32x4xf32, #tpu.memory_space<vmem>>, vector<32x4xf32>
    %cst = arith.constant dense<0.000000e+00> : vector<16x4xf32>
    %2 = tpu.matmul %0, %1, %cst {dimension_numbers = #tpu.dot_dimension_numbers<[1], [0], [0], [1], [0, 0, 1, 1], [], []>} : vector<16x32xf32>, vector<32x4xf32>, vector<16x4xf32> -> vector<16x4xf32>
    %c0_3 = arith.constant 0 : index
    %c0_4 = arith.constant 0 : index
    %3 = vector.load %arg4[%c0_3, %c0_4] : memref<1x4xf32, #tpu.memory_space<vmem>>, vector<1x4xf32>
    %4 = vector.broadcast %3 : vector<1x4xf32> to vector<16x4xf32>
    %5 = arith.addf %2, %4 : vector<16x4xf32>
    %cst_5 = arith.constant dense<0xFF800000> : vector<16xf32>
    %6 = vector.multi_reduction <maximumf>, %5, %cst_5 [1] : vector<16x4xf32> to vector<16xf32>
    %7 = vector.shape_cast %6 : vector<16xf32> to vector<16x1xf32>
    %8 = vector.broadcast %7 : vector<16x1xf32> to vector<16x4xf32>
    %9 = arith.subf %5, %8 : vector<16x4xf32>
    %10 = math.exp %9 : vector<16x4xf32>
    %cst_6 = arith.constant dense<0.000000e+00> : vector<16xf32>
    %11 = vector.multi_reduction <add>, %10, %cst_6 [1] : vector<16x4xf32> to vector<16xf32>
    %12 = vector.shape_cast %11 : vector<16xf32> to vector<16x1xf32>
    %13 = tpu.reciprocal %12 {approx = true} : vector<16x1xf32> -> vector<16x1xf32>
    %14 = vector.broadcast %13 : vector<16x1xf32> to vector<16x4xf32>
    %15 = arith.mulf %10, %14 : vector<16x4xf32>
    %c0_7 = arith.constant 0 : index
    %c0_8 = arith.constant 0 : index
    %16 = vector.load %arg1[%c0_7, %c0_8] : memref<16x4xf32, #tpu.memory_space<vmem>>, vector<16x4xf32>
    %17 = arith.mulf %16, %15 : vector<16x4xf32>
    %cst_9 = arith.constant dense<0.000000e+00> : vector<16xf32>
    %18 = vector.multi_reduction <add>, %17, %cst_9 [1] : vector<16x4xf32> to vector<16xf32>
    %19 = vector.shape_cast %18 : vector<16xf32> to vector<1x1x16xf32>
    %c0_10 = arith.constant 0 : index
    %c0_11 = arith.constant 0 : index
    %c0_12 = arith.constant 0 : index
    %20 = vector.load %arg5[%c0_10, %c0_11, %c0_12] : memref<1x1x16xf32, #tpu.memory_space<vmem>>, vector<1x1x16xf32>
    tpu.vector_store %arg5[%c0_10, %c0_11, %c0_12], %19 {strides = array<i32>} : memref<1x1x16xf32, #tpu.memory_space<vmem>>, vector<1x1x16xf32>,
    return
  }
  func.func @transform_0(%arg0: i32) -> (i32, i32) {
    %c0_i32 = arith.constant 0 : i32
    %c0_i32_0 = arith.constant 0 : i32
    return %arg0, %c0_i32 : i32, i32
  }
  func.func @transform_1(%arg0: i32) -> (i32, i32) {
    %c0_i32 = arith.constant 0 : i32
    %c0_i32_0 = arith.constant 0 : i32
    return %arg0, %c0_i32 : i32, i32
  }
  func.func @transform_2(%arg0: i32) -> (i32, i32) {
    %c0_i32 = arith.constant 0 : i32
    %c0_i32_0 = arith.constant 0 : i32
    %c0_i32_1 = arith.constant 0 : i32
    return %c0_i32, %c0_i32_0 : i32, i32
  }
  func.func @transform_3(%arg0: i32) -> (i32, i32) {
    %c0_i32 = arith.constant 0 : i32
    %c0_i32_0 = arith.constant 0 : i32
    %c0_i32_1 = arith.constant 0 : i32
    return %c0_i32, %c0_i32_0 : i32, i32
  }
  func.func @transform_4(%arg0: i32) -> (i32, i32, i32) {
    %c0_i32 = arith.constant 0 : i32
    %c0_i32_0 = arith.constant 0 : i32
    %c0_i32_1 = arith.constant 0 : i32
    return %arg0, %c0_i32, %c0_i32_0 : i32, i32, i32
  }
}

</mosaic_0001>

<llo_original>
// kernel: tpu_custom_call.1
$region0: #{tpu_custom_call.1}
  #allocation0 [shape = 'u32[]', space=smem, size = 0x4, offset = 0x4, fixed_abs, tag = 'smem constant byte address 0x4 - core index']
  #allocation1 [shape = 'u32[72,128]{1,0:T(1,128)}', space=vmem, size = 0x9000, scoped, tag = 'internal scratch']
  %s0 = inlined_call_operand.vmem [shape: f32[26,4], index: 0, kind: input, shape index: {}]
  %s1 = inlined_call_operand.vmem [shape: f32[26,32], index: 1, kind: input, shape index: {}]
  %s2 = inlined_call_operand.vmem [shape: f32[32,4], index: 2, kind: input, shape index: {}]
  %s3 = inlined_call_operand.vmem [shape: f32[1,4], index: 3, kind: input, shape index: {}]
  %s4 = inlined_call_operand.hbm [shape: f32[2,1,16], index: 4, kind: output, shape index: {}]
  %s5 = sld [smem:[#allocation0]]
  $region49: #{tpu_custom_call.1} parent=0
    _
  %s7 = ssub.s32 1, %s5
  %s8 = scalar_select 0, %s7, %s5
  $region1: #{tpu_custom_call.1} parent=0
    #allocation2 [shape = 'u8[1024]{0}', space=vmem, size = 0x400, scoped, tag = 'output window, operand 0']
    #allocation3 [shape = 's32[2]{0}', space=sflag, size = 0x8, scoped, tag = 'scoped memory for tpu_custom_call.1']
    %9 = vsyncpa [#allocation3], 0
    %s10 = scalar_lea.sflag [#allocation3], 1
    %11 = vsyncpa %s10, 0
    loop: start=0, step=1, limit=4
    $region2: #{tpu_custom_call.1} parent=1 // loop_pre_header
      _
    $region3: #{tpu_custom_call.1} parent=1 // loop_header
      %s13 = sphi 0, %s17
      %p14 = scmp.ge.s32.totalorder %s13, 4
      %s23 = sphi 0, %s25
      %s26 = sphi 0, %s23
      %s27 = sphi 0, %s26
      %s43 = sphi 0, %s27
      %s49 = sphi 0, %s51
      %s52 = sphi 0, %s49
      %s53 = sphi 0, %s52
      %s69 = sphi 0, %s53
      %s73 = sphi 0, %s73
      %s75 = sphi 0, %s73
      %s76 = sphi 0, %s75
      %s90 = sphi 0, %s76
      %s94 = sphi 0, %s94
      %s96 = sphi 0, %s94
      %s97 = sphi 0, %s96
      %s111 = sphi 0, %s97
      %s117 = sphi 0, %s119
      %s120 = sphi 0, %s117
      %s121 = sphi 0, %s120
      %s137 = sphi 0, %s121
    $region4: #{tpu_custom_call.1} parent=1 // loop_header_branch
      %16 = sbr.rel (%p14) target = $region8
    $region5: #{tpu_custom_call.1} parent=1 // loop_body
      %s18 = ssub.s32 %s13, 1
      %s19 = ssub.s32 %s13, 2
      %s20 = sadd.s32 %s13, 1
      %s21 = ssub.s32 %s13, %s20
      %p22 = scmp.eq.s32.totalorder %s21, 0
      %s24 = sadd.s32 %s23, 1
      %s25 = scalar_select %p22, %s23, %s24
      %p28 = pneg %p22
      %p29 = scmp.eq.s32.totalorder %s13, 1
      %p30 = por %p28, %p29
      %p31 = scmp.ne.s32.totalorder %s23, %s26
      %p32 = scmp.eq.s32.totalorder %s13, 0
      %p33 = por %p31, %p32
      %p34 = scmp.ne.s32.totalorder %s23, %s26
      %p35 = scmp.eq.s32.totalorder %s18, 1
      %p36 = por %p34, %p35
      %p37 = scmp.ne.s32.totalorder %s26, %s27
      %p38 = scmp.eq.s32.totalorder %s18, 0
      %p39 = por %p37, %p38
      %p40 = scmp.ne.s32.totalorder %s26, %s27
      %p41 = scmp.eq.s32.totalorder %s19, 1
      %p42 = por %p40, %p41
      %p44 = scmp.ne.s32.totalorder %s27, %s43
      %p45 = scmp.eq.s32.totalorder %s19, 0
      %p46 = por %p44, %p45
      %s47 = ssub.s32 %s13, %s20
      %p48 = scmp.eq.s32.totalorder %s47, 0
      %s50 = sadd.s32 %s49, 1
      %s51 = scalar_select %p48, %s49, %s50
      %p54 = pneg %p48
      %p55 = scmp.eq.s32.totalorder %s13, 1
      %p56 = por %p54, %p55
      %p57 = scmp.ne.s32.totalorder %s49, %s52
      %p58 = scmp.eq.s32.totalorder %s13, 0
      %p59 = por %p57, %p58
      %p60 = scmp.ne.s32.totalorder %s49, %s52
      %p61 = scmp.eq.s32.totalorder %s18, 1
      %p62 = por %p60, %p61
      %p63 = scmp.ne.s32.totalorder %s52, %s53
      %p64 = scmp.eq.s32.totalorder %s18, 0
      %p65 = por %p63, %p64
      %p66 = scmp.ne.s32.totalorder %s52, %s53
      %p67 = scmp.eq.s32.totalorder %s19, 1
      %p68 = por %p66, %p67
      %p70 = scmp.ne.s32.totalorder %s53, %s69
      %p71 = scmp.eq.s32.totalorder %s19, 0
      %p72 = por %p70, %p71
      %s74 = sadd.s32 %s73, 1
      %p77 = scmp.eq.s32.totalorder %s13, 1
      %p78 = scmp.ne.s32.totalorder %s73, %s75
      %p79 = scmp.eq.s32.totalorder %s13, 0
      %p80 = por %p78, %p79
      %p81 = scmp.ne.s32.totalorder %s73, %s75
      %p82 = scmp.eq.s32.totalorder %s18, 1
      %p83 = por %p81, %p82
      %p84 = scmp.ne.s32.totalorder %s75, %s76
      %p85 = scmp.eq.s32.totalorder %s18, 0
      %p86 = por %p84, %p85
      %p87 = scmp.ne.s32.totalorder %s75, %s76
      %p88 = scmp.eq.s32.totalorder %s19, 1
      %p89 = por %p87, %p88
      %p91 = scmp.ne.s32.totalorder %s76, %s90
      %p92 = scmp.eq.s32.totalorder %s19, 0
      %p93 = por %p91, %p92
      %s95 = sadd.s32 %s94, 1
      %p98 = scmp.eq.s32.totalorder %s13, 1
      %p99 = scmp.ne.s32.totalorder %s94, %s96
      %p100 = scmp.eq.s32.totalorder %s13, 0
      %p101 = por %p99, %p100
      %p102 = scmp.ne.s32.totalorder %s94, %s96
      %p103 = scmp.eq.s32.totalorder %s18, 1
      %p104 = por %p102, %p103
      %p105 = scmp.ne.s32.totalorder %s96, %s97
      %p106 = scmp.eq.s32.totalorder %s18, 0
      %p107 = por %p105, %p106
      %p108 = scmp.ne.s32.totalorder %s96, %s97
      %p109 = scmp.eq.s32.totalorder %s19, 1
      %p110 = por %p108, %p109
      %p112 = scmp.ne.s32.totalorder %s97, %s111
      %p113 = scmp.eq.s32.totalorder %s19, 0
      %p114 = por %p112, %p113
      %s115 = ssub.s32 %s13, %s20
      %p116 = scmp.eq.s32.totalorder %s115, 0
      %s118 = sadd.s32 %s117, 1
      %s119 = scalar_select %p116, %s117, %s118
      %p122 = pneg %p116
      %p123 = scmp.eq.s32.totalorder %s13, 1
      %p124 = por %p122, %p123
      %p125 = scmp.ne.s32.totalorder %s117, %s120
      %p126 = scmp.eq.s32.totalorder %s13, 0
      %p127 = por %p125, %p126
      %p128 = scmp.ne.s32.totalorder %s117, %s120
      %p129 = scmp.eq.s32.totalorder %s18, 1
      %p130 = por %p128, %p129
      %p131 = scmp.ne.s32.totalorder %s120, %s121
      %p132 = scmp.eq.s32.totalorder %s18, 0
      %p133 = por %p131, %p132
      %p134 = scmp.ne.s32.totalorder %s120, %s121
      %p135 = scmp.eq.s32.totalorder %s19, 1
      %p136 = por %p134, %p135
      %p138 = scmp.ne.s32.totalorder %s121, %s137
      %p139 = scmp.eq.s32.totalorder %s19, 0
      %p140 = por %p138, %p139
      %p141 = scmp.le.s32.totalorder 1, %s13
      %p142 = scmp.lt.s32.totalorder %s13, 3
      %p143 = pnand %p141, %p142
      %p144 = pneg %p143
      // Predicated region
      $region9: #{tpu_custom_call.1} parent=5 // pred_check
        _
      $region10: #{tpu_custom_call.1} parent=5 // pred_check_branch
        %146 = sbr.rel (%p143) target = $region12
      $region11: #{tpu_custom_call.1} parent=5 // pred_region
        %s147 = ssub.s32 %s13, 1
        // Predicated region
        $region13: #{tpu_custom_call.1} parent=11 // pred_check
          %p148 = pneg %p86
        $region14: #{tpu_custom_call.1} parent=11 // pred_check_branch
          %150 = sbr.rel (%p148) target = $region16
        $region15: #{tpu_custom_call.1} parent=11 // pred_region
          _
        $region16: #{tpu_custom_call.1} parent=11 // pred_fallthru
          _
        // Predicated region
        $region17: #{tpu_custom_call.1} parent=11 // pred_check
          %p151 = pneg %p107
        $region18: #{tpu_custom_call.1} parent=11 // pred_check_branch
          %153 = sbr.rel (%p151) target = $region20
        $region19: #{tpu_custom_call.1} parent=11 // pred_region
          _
        $region20: #{tpu_custom_call.1} parent=11 // pred_fallthru
          _
      $region12: #{tpu_custom_call.1} parent=5 // pred_fallthru
        _
      %p154 = scmp.lt.s32.totalorder %s13, 2
      // Predicated region
      $region21: #{tpu_custom_call.1} parent=5 // pred_check
        %p155 = pneg %p154
      $region22: #{tpu_custom_call.1} parent=5 // pred_check_branch
        %157 = sbr.rel (%p155) target = $region24
      $region23: #{tpu_custom_call.1} parent=5 // pred_region
        // Predicated region
        $region25: #{tpu_custom_call.1} parent=23 // pred_check
          %p158 = pneg %p33
        $region26: #{tpu_custom_call.1} parent=23 // pred_check_branch
          %160 = sbr.rel (%p158) target = $region28
        $region27: #{tpu_custom_call.1} parent=23 // pred_region
          %s161 = smul.u32 2, %s13
          %p162 = scmp.lt.s32.totalorder %s161, 3
          %s163 = scalar_select %p162, %s161, 3
          %s164 = smul.addr %s163, 8
          %s165 = scalar_lea.vmem %s0, %s164
          %s166 = smul.u32 2, %s13
        $region28: #{tpu_custom_call.1} parent=23 // pred_fallthru
          _
        // Predicated region
        $region29: #{tpu_custom_call.1} parent=23 // pred_check
          %p167 = pneg %p59
        $region30: #{tpu_custom_call.1} parent=23 // pred_check_branch
          %169 = sbr.rel (%p167) target = $region32
        $region31: #{tpu_custom_call.1} parent=23 // pred_region
          %s170 = smul.u32 2, %s13
          %p171 = scmp.lt.s32.totalorder %s170, 3
          %s172 = scalar_select %p171, %s170, 3
          %s173 = smul.addr %s172, 8
          %s174 = scalar_lea.vmem %s1, %s173
          %s175 = smul.u32 2, %s13
        $region32: #{tpu_custom_call.1} parent=23 // pred_fallthru
          _
      $region24: #{tpu_custom_call.1} parent=5 // pred_fallthru
        _
      %p176 = scmp.le.s32.totalorder 1, %s13
      %p177 = scmp.lt.s32.totalorder %s13, 3
      %p178 = pnand %p176, %p177
      %p179 = pneg %p178
      // Predicated region
      $region33: #{tpu_custom_call.1} parent=5 // pred_check
        _
      $region34: #{tpu_custom_call.1} parent=5 // pred_check_branch
        %181 = sbr.rel (%p178) target = $region36
      $region35: #{tpu_custom_call.1} parent=5 // pred_region
        %s182 = ssub.s32 %s13, 1
        %s183 = smul.u32 2, %s18
        %p184 = scmp.lt.s32.totalorder %s183, 3
        %s185 = scalar_select %p184, %s183, 3
        %s186 = smul.addr %s185, 8
        %s187 = scalar_lea.vmem %s0, %s186
        %p188 = pneg %p39
        %p189 = pneg %p36
        %s190 = smul.u32 2, %s18
        %p191 = scmp.lt.s32.totalorder %s190, 3
        %s192 = scalar_select %p191, %s190, 3
        %s193 = smul.addr %s192, 8
        %s194 = scalar_lea.vmem %s1, %s193
        %p195 = pneg %p65
        %p196 = pneg %p62
        %p197 = pneg %p86
        %p198 = pneg %p83
        %p199 = pneg %p107
        %p200 = pneg %p104
        %p201 = pneg %p133
        %p202 = pneg %p130
        %s203 = sand.u32 %s120, 1
        %s204 = scalar_lea.sflag [#allocation3], %s203
        %s205 = sand.u32 %s120, 1
        %s206 = scalar_lea.vmem [#allocation2], %s205
        %s207 = smul.u32 2, %s18
        %p208 = scmp.lt.s32.totalorder %s207, 3
        %s209 = scalar_select %p208, %s207, 3
        %s210 = smul.addr %s209, 8
        %s211 = scalar_lea.vmem %s0, %s210
        %s212 = smul.u32 2, %s18
        %s213 = smul.u32 2, %s18
        %p214 = scmp.lt.s32.totalorder %s213, 3
        %s215 = scalar_select %p214, %s213, 3
        %s216 = smul.addr %s215, 8
        %s217 = scalar_lea.vmem %s1, %s216
        %s218 = smul.u32 2, %s18
        %v219 = vld [vmem:[%s217] sm:$0xff]
        %v220 = vld [vmem:[%s217 + $0x8] sm:$0xff]
        %v221 = vld [vmem:[%s2] sm:$0xff]
        %v222 = vld [vmem:[%s2 + $0x8] sm:$0xff]
        %v223 = vld [vmem:[%s2 + $0x10] sm:$0xff]
        %v224 = vld [vmem:[%s2 + $0x18] sm:$0xff]
        %v225 = vld [vmem:[%s3] sm:$0x1]
        %v227 = vperm.slane %v225, 0
        %vm229 = vcmask 261120
        %v231 = vsel %vm229, %v219, 0
        %v234 = vsel %vm229, %v220, 0
        %236 = vmatpush.msra.mxu0 0.0
        %237 = vmatpush.msra.mxu0 0.0
        %238 = vmatpush.msra.mxu0 0.0
        %239 = vmatpush.msra.mxu0 0.0
        %240 = vmatpush.msra.mxu0 0.0
        %241 = vmatpush.msra.mxu0 0.0
        %242 = vmatpush.msra.mxu0 0.0
        %243 = vmatpush.msra.mxu0 0.0
        %244 = vmatpush.msra.mxu0 0.0
        %245 = vmatpush.msra.mxu0 0.0
        %246 = vmatpush.msra.mxu0 0.0
        %247 = vmatpush.msra.mxu0 0.0
        %248 = vmatpush.msra.mxu0 %v224
        %249 = vmatpush.msra.mxu0 %v223
        %250 = vmatpush.msra.mxu0 %v222
        %251 = vmatpush.msra.mxu0 %v221
        %252 = vmatmul.f32.gmra.mxu0 %v231
        %v253 = vpop.f32.mrf.mxu0
        %v254 = vadd.f32 %v227, %v253
        %255 = vmatmul.f32.gmra.mxu0 %v234
        %v256 = vpop.f32.mrf.mxu0
        %v257 = vadd.f32 %v227, %v256
        %258 = vdwg.mxu0
        %vm259 = vcmask 31744
        %v260 = vsel %vm259, %v254, -inf
        %261 = vmax.xlane.f32.xlu0 %v260
        %v262 = vpop.xlane.xlu0 %261
        %v263 = vsel %vm259, %v257, -inf
        %264 = vmax.xlane.f32.xlu0 %v263
        %v265 = vpop.xlane.xlu0 %264
        %v266 = vsub.f32 %v254, %v262
        %v267 = vsub.f32 %v257, %v265
        %v268 = vmul.f32 %v266, 1.442695
        %v269 = vpow.pop %v268
        %v270 = vmul.f32 %v267, 1.442695
        %v271 = vpow.pop %v270
        %v272 = vsel %vm259, %v269, 0.0
        %273 = vadd.xlane.f32.xlu0 %v272
        %v274 = vpop.xlane.xlu0 %273
        %v275 = vsel %vm259, %v271, 0.0
        %276 = vadd.xlane.f32.xlu0 %v275
        %v277 = vpop.xlane.xlu0 %276
        %v278 = vrcp.pop %v274
        %v279 = vrcp.pop %v277
        %v280 = vmul.f32 %v269, %v278
        %v281 = vmul.f32 %v271, %v279
        %v282 = vld [vmem:[%s211] sm:$0xff]
        %v283 = vld [vmem:[%s211 + $0x8] sm:$0xff]
        %v284 = vmul.f32 %v282, %v280
        %v285 = vmul.f32 %v283, %v281
        %v286 = vsel %vm259, %v284, 0.0
        %287 = vadd.xlane.f32.xlu0 %v286
        %v288 = vpop.xlane.xlu0 %287
        %v289 = vsel %vm259, %v285, 0.0
        %290 = vadd.xlane.f32.xlu0 %v289
        %v291 = vpop.xlane.xlu0 %290
        %v294 = vlaneseq
        %v295 = vand.u32 %v294, 127
        %v296 = vperm.slane %v288, %v295
        %v297 = vadd.s32 %v295, 4294967288
        %v298 = vperm.slane %v291, %v297
        %vm299 = vcmask 130112
        %v300 = vsel %vm299, %v298, %v296
        %vm302 = vcmask 122880
        %303 = vst.msk [vmem:[%s206] sm:$0x1] %vm302, %v300
        %s304 = sand.u32 %s120, 1
        %s305 = scalar_lea.sflag [#allocation3], %s304
        %s306 = sand.u32 %s120, 1
        %s307 = scalar_lea.vmem [#allocation2], %s306
        // Predicated region
        $region37: #{tpu_custom_call.1} parent=35 // pred_check
          %p308 = pneg %p130
        $region38: #{tpu_custom_call.1} parent=35 // pred_check_branch
          %310 = sbr.rel (%p308) target = $region40
        $region39: #{tpu_custom_call.1} parent=35 // pred_region
          %312 = vsyncadd %s305, 0
          %s313 = scalar_lea.hbm %s4, %s18
          %s315 = sshll.u32 %s307, 4
          %s316 = int_to_ptr.vmem [resolvable:$true] %s315
          %s317 = sshll.u32 %s313, 4
          %s318 = int_to_ptr.hbm [resolvable:$true] %s317
          %320 = dma.vmem_to_hbm [thread:$0]  %s316, 16, %s318, %s305
        $region40: #{tpu_custom_call.1} parent=35 // pred_fallthru
          _
      $region36: #{tpu_custom_call.1} parent=5 // pred_fallthru
        _
      %p321 = scmp.le.s32.totalorder 2, %s13
      // Predicated region
      $region41: #{tpu_custom_call.1} parent=5 // pred_check
        %p322 = pneg %p321
      $region42: #{tpu_custom_call.1} parent=5 // pred_check_branch
        %324 = sbr.rel (%p322) target = $region44
      $region43: #{tpu_custom_call.1} parent=5 // pred_region
        %s325 = ssub.s32 %s13, 2
        // Predicated region
        $region45: #{tpu_custom_call.1} parent=43 // pred_check
          %p326 = pneg %p136
        $region46: #{tpu_custom_call.1} parent=43 // pred_check_branch
          %328 = sbr.rel (%p326) target = $region48
        $region47: #{tpu_custom_call.1} parent=43 // pred_region
          %s329 = sand.u32 %s121, 1
          %s330 = scalar_lea.sflag [#allocation3], %s329
          %s331 = sand.u32 %s121, 1
          %s332 = scalar_lea.vmem [#allocation2], %s331
          %334 = dma.done %s330, 16
        $region48: #{tpu_custom_call.1} parent=43 // pred_fallthru
          _
      $region44: #{tpu_custom_call.1} parent=5 // pred_fallthru
        _
    $region6: #{tpu_custom_call.1} parent=1 // loop_footer
      %s17 = sadd.s32 1, %s13
    $region7: #{tpu_custom_call.1} parent=1 // loop_footer_branch
      %12 = sbr.rel target = $region3
    $region8: #{tpu_custom_call.1} parent=1 // loop_exit
      _
    %335 = vsyncpa [#allocation3], 1
    %s336 = scalar_lea.sflag [#allocation3], 1
    %337 = vsyncpa %s336, 1

</llo_original>
